<compile_context>
chip_gen: v7x
topology: tpu7x:2x2x1
jax: 0.10.0
libtpu: 0.0.40
codegen_flags: <defaults>
</compile_context>

<pallas_src>
import functools

import jax
import jax.numpy as jnp
from jax.experimental import pallas as pl
from jax.experimental.pallas import tpu as pltpu


# ----------------------------- Pallas kernel ------------------------------- #
def _block_kernel(x_ref, w_ref, rw_ref, bias_ref, out_ref, *, ks, dil, pad):
    """One batch tile per grid step.

    x_ref    : (nb, Cin, L)        input tile (no padding; circular shift in-kernel)
    w_ref    : (Cout, K*Cin)       weight-normed conv weight, taps flattened
    rw_ref   : (Cout, Cin)         residual 1x1 conv weight
    bias_ref : (Cout, 2)           column 0 = conv bias, column 1 = residual bias
    out_ref  : (nb, Cout, L)       output tile
    """
    nb, _, L = x_ref.shape

    # Hoisted bias views (Cout, 1), broadcast over L inside the loop.
    b_conv = bias_ref[:, 0:1]
    b_res = bias_ref[:, 1:2]

    w = w_ref[...]                 # (Cout, K*Cin)
    rw = rw_ref[...]               # (Cout, Cin)

    for n in range(nb):            # nb is small & static -> unrolled
        xn = x_ref[n]              # (Cin, L)

        # Circular taps via XLU lane rotation:
        #   tap_k[i] = x[(i + k*dil - pad) mod L]  ==  roll(x, pad - k*dil)[i]
        taps = []
        for k in range(ks):
            s = (pad - k * dil) % L
            taps.append(xn if s == 0 else pltpu.roll(xn, shift=s, axis=1))
        stacked = jnp.concatenate(taps, axis=0)          # (K*Cin, L)

        # Single fused MXU matmul for all K taps, plus the 1x1 residual conv.
        conv = jnp.dot(w, stacked,
                       preferred_element_type=jnp.float32) + b_conv
        res = jnp.dot(rw, xn,
                      preferred_element_type=jnp.float32) + b_res

        out_ref[n] = jnp.maximum(conv, 0.0) + res


# ------------------------------- wrapper ------------------------------------ #
def block_forward(x, w_v, w_g, b, rw, rb, *, pad, dil, batch_block=None):
    """Forward pass of Block (model='CDIL', deformable=False).

    x   : (N, Cin, L)      float32
    w_v : (Cout, Cin, K)   weight_norm 'v' parameter
    w_g : (Cout,)          weight_norm 'g' parameter
    b   : (Cout,)          conv bias
    rw  : (Cout, Cin)      residual 1x1 conv weight
    rb  : (Cout,)          residual 1x1 conv bias
    """
    N, cin, L = x.shape
    cout, _, K = w_v.shape
    L_out = L + 2 * pad - dil * (K - 1)
    assert L_out == L, "choose pad = dil*(ks-1)//2 with odd ks so shapes match"

    nb = N if batch_block is None else batch_block
    assert N % nb == 0, "batch_block must divide N"

    # ---- glue: weight-norm reparameterization (per output channel, dim=0) ----
    v_norm = jnp.sqrt(jnp.sum(w_v.astype(jnp.float32) ** 2, axis=(1, 2),
                              keepdims=True))
    w_eff = (w_g[:, None, None] * w_v / v_norm).astype(jnp.float32)  # (Cout,Cin,K)
    # Flatten taps: row c_out = [W[:, :, 0], W[:, :, 1], ...]  -> (Cout, K*Cin)
    w_flat = jnp.transpose(w_eff, (0, 2, 1)).reshape(cout, K * cin)

    # Pack both biases into one small VMEM tile: (Cout, 2).
    bias2 = jnp.stack([b, rb], axis=1).astype(jnp.float32)

    kernel = functools.partial(_block_kernel, ks=K, dil=dil, pad=pad)

    return pl.pallas_call(
        kernel,
        out_shape=jax.ShapeDtypeStruct((N, cout, L), jnp.float32),
        grid_spec=pltpu.PrefetchScalarGridSpec(
            num_scalar_prefetch=0,
            grid=(N // nb,),
            in_specs=[
                pl.BlockSpec((nb, cin, L), lambda i: (i, 0, 0)),     # x
                pl.BlockSpec((cout, K * cin), lambda i: (0, 0)),     # fused conv W
                pl.BlockSpec((cout, cin), lambda i: (0, 0)),         # residual W
                pl.BlockSpec((cout, 2), lambda i: (0, 0)),           # [b | rb]
            ],
            out_specs=pl.BlockSpec((nb, cout, L), lambda i: (i, 0, 0)),
        ),
        compiler_params=pltpu.CompilerParams(
            dimension_semantics=("parallel",)),
    )(x.astype(jnp.float32), w_flat, rw.astype(jnp.float32), bias2)


# --------------------------- pure-JAX reference ------------------------------ #
def _reference(x, w_v, w_g, b, rw, rb, *, pad, dil):
    v_norm = jnp.sqrt(jnp.sum(w_v ** 2, axis=(1, 2), keepdims=True))
    w_eff = w_g[:, None, None] * w_v / v_norm
    xpad = jnp.concatenate([x[..., -pad:], x, x[..., :pad]], axis=-1)
    conv = jax.lax.conv_general_dilated(
        xpad, w_eff, window_strides=(1,), padding="VALID",
        rhs_dilation=(dil,), dimension_numbers=("NCH", "OIH", "NCH"))
    conv = conv + b[None, :, None]
    res = jax.lax.conv_general_dilated(
        x, rw[:, :, None], window_strides=(1,), padding="VALID",
        dimension_numbers=("NCH", "OIH", "NCH")) + rb[None, :, None]
    return jnp.maximum(conv, 0.0) + res


# --------------------------------- main -------------------------------------- #
if __name__ == "__main__":
    # Block(model='CDIL', c_in=4, c_out=8, ks=3, pad=2, dil=2, deformable=False)
    N, C_IN, C_OUT, L = 2, 4, 8, 128
    KS, DIL = 3, 2
    PAD = DIL * (KS - 1) // 2  # = 2

    key = jax.random.PRNGKey(0)
    kx, kv, kg, kb, krw, krb = jax.random.split(key, 6)

    x = jax.random.normal(kx, (N, C_IN, L), dtype=jnp.float32)
    # weight_norm parameters (v initialized ~ N(0, 0.01), g from its norm-scale)
    w_v = 0.01 * jax.random.normal(kv, (C_OUT, C_IN, KS), dtype=jnp.float32)
    w_g = 0.01 + 0.005 * jax.random.uniform(kg, (C_OUT,), dtype=jnp.float32)
    b = 0.01 * jax.random.normal(kb, (C_OUT,), dtype=jnp.float32)
    # residual 1x1 conv (c_in != c_out)
    rw = 0.01 * jax.random.normal(krw, (C_OUT, C_IN), dtype=jnp.float32)
    rb = 0.01 * jax.random.normal(krb, (C_OUT,), dtype=jnp.float32)

    fwd = jax.jit(functools.partial(block_forward, pad=PAD, dil=DIL))
    y = fwd(x, w_v, w_g, b, rw, rb)
    y = jax.block_until_ready(y)

    y_ref = _reference(x, w_v, w_g, b, rw, rb, pad=PAD, dil=DIL)
    assert y.shape == (N, C_OUT, L)
    assert jnp.allclose(y, y_ref, atol=1e-5, rtol=1e-5), "mismatch vs reference"

    print("KERNEL_OK")
</pallas_src>

<mosaic_0001>
module attributes {stable_mosaic.version = 11 : i64} {
  func.func @_block_kernel(%arg0: i32, %arg1: memref<2x4x128xf32, #tpu.memory_space<vmem>>, %arg2: memref<8x12xf32, #tpu.memory_space<vmem>>, %arg3: memref<8x4xf32, #tpu.memory_space<vmem>>, %arg4: memref<8x2xf32, #tpu.memory_space<vmem>>, %arg5: memref<2x8x128xf32, #tpu.memory_space<vmem>>) attributes {dimension_semantics = [#tpu.dimension_semantics<parallel>], iteration_bounds = array<i64: 1>, scalar_prefetch = 0 : i64, scratch_operands = 0 : i64, tpu.core_type = #tpu.core_type<tc>, window_params = [{transform_indices = @transform_0, window_bounds = array<i64: 2, 4, 128>}, {pipeline_mode = #tpu.pipeline_mode<synchronous>, transform_indices = @transform_1, window_bounds = array<i64: 8, 12>}, {pipeline_mode = #tpu.pipeline_mode<synchronous>, transform_indices = @transform_2, window_bounds = array<i64: 8, 4>}, {pipeline_mode = #tpu.pipeline_mode<synchronous>, transform_indices = @transform_3, window_bounds = array<i64: 8, 2>}, {transform_indices = @transform_4, window_bounds = array<i64: 2, 8, 128>}]} {
    %c0 = arith.constant 0 : index
    %c0_0 = arith.constant 0 : index
    %0 = vector.load %arg4[%c0, %c0_0] : memref<8x2xf32, #tpu.memory_space<vmem>>, vector<8x1xf32>
    %c0_1 = arith.constant 0 : index
    %c1 = arith.constant 1 : index
    %1 = vector.load %arg4[%c0_1, %c1] : memref<8x2xf32, #tpu.memory_space<vmem>>, vector<8x1xf32>
    %c0_2 = arith.constant 0 : index
    %c0_3 = arith.constant 0 : index
    %2 = vector.load %arg2[%c0_2, %c0_3] : memref<8x12xf32, #tpu.memory_space<vmem>>, vector<8x12xf32>
    %c0_4 = arith.constant 0 : index
    %c0_5 = arith.constant 0 : index
    %3 = vector.load %arg3[%c0_4, %c0_5] : memref<8x4xf32, #tpu.memory_space<vmem>>, vector<8x4xf32>
    %c0_6 = arith.constant 0 : index
    %c0_7 = arith.constant 0 : index
    %c0_8 = arith.constant 0 : index
    %4 = vector.load %arg1[%c0_6, %c0_7, %c0_8] : memref<2x4x128xf32, #tpu.memory_space<vmem>>, vector<1x4x128xf32>
    %5 = vector.shape_cast %4 : vector<1x4x128xf32> to vector<4x128xf32>
    %c2_i32 = arith.constant 2 : i32
    %6 = tpu.dynamic_rotate %5 by %c2_i32 dim 1 : vector<4x128xf32>, i32 -> vector<4x128xf32>
    %c126_i32 = arith.constant 126 : i32
    %7 = tpu.dynamic_rotate %5 by %c126_i32 dim 1 : vector<4x128xf32>, i32 -> vector<4x128xf32>
    %8 = tpu.concatenate %6, %5, %7 in 0 : vector<4x128xf32>, vector<4x128xf32>, vector<4x128xf32> -> vector<12x128xf32>
    %cst = arith.constant dense<0.000000e+00> : vector<8x128xf32>
    %9 = tpu.matmul %2, %8, %cst {dimension_numbers = #tpu.dot_dimension_numbers<[1], [0], [0], [1], [0, 0, 1, 1], [], []>} : vector<8x12xf32>, vector<12x128xf32>, vector<8x128xf32> -> vector<8x128xf32>
    %10 = vector.broadcast %0 : vector<8x1xf32> to vector<8x128xf32>
    %11 = arith.addf %9, %10 : vector<8x128xf32>
    %cst_9 = arith.constant dense<0.000000e+00> : vector<8x128xf32>
    %12 = tpu.matmul %3, %5, %cst_9 {dimension_numbers = #tpu.dot_dimension_numbers<[1], [0], [0], [1], [0, 0, 1, 1], [], []>} : vector<8x4xf32>, vector<4x128xf32>, vector<8x128xf32> -> vector<8x128xf32>
    %13 = vector.broadcast %1 : vector<8x1xf32> to vector<8x128xf32>
    %14 = arith.addf %12, %13 : vector<8x128xf32>
    %cst_10 = arith.constant 0.000000e+00 : f32
    %15 = vector.broadcast %cst_10 : f32 to vector<8x128xf32>
    %16 = arith.maximumf %11, %15 : vector<8x128xf32>
    %17 = arith.addf %16, %14 : vector<8x128xf32>
    %c0_11 = arith.constant 0 : index
    %c0_12 = arith.constant 0 : index
    %c0_13 = arith.constant 0 : index
    %18 = vector.load %arg5[%c0_11, %c0_12, %c0_13] : memref<2x8x128xf32, #tpu.memory_space<vmem>>, vector<1x8x128xf32>
    %19 = vector.shape_cast %18 : vector<1x8x128xf32> to vector<8x128xf32>
    %20 = vector.shape_cast %17 : vector<8x128xf32> to vector<1x8x128xf32>
    tpu.vector_store %arg5[%c0_11, %c0_12, %c0_13], %20 {strides = array<i32>} : memref<2x8x128xf32, #tpu.memory_space<vmem>>, vector<1x8x128xf32>,
    %c1_14 = arith.constant 1 : index
    %c0_15 = arith.constant 0 : index
    %c0_16 = arith.constant 0 : index
    %21 = vector.load %arg1[%c1_14, %c0_15, %c0_16] : memref<2x4x128xf32, #tpu.memory_space<vmem>>, vector<1x4x128xf32>
    %22 = vector.shape_cast %21 : vector<1x4x128xf32> to vector<4x128xf32>
    %c2_i32_17 = arith.constant 2 : i32
    %23 = tpu.dynamic_rotate %22 by %c2_i32_17 dim 1 : vector<4x128xf32>, i32 -> vector<4x128xf32>
    %c126_i32_18 = arith.constant 126 : i32
    %24 = tpu.dynamic_rotate %22 by %c126_i32_18 dim 1 : vector<4x128xf32>, i32 -> vector<4x128xf32>
    %25 = tpu.concatenate %23, %22, %24 in 0 : vector<4x128xf32>, vector<4x128xf32>, vector<4x128xf32> -> vector<12x128xf32>
    %cst_19 = arith.constant dense<0.000000e+00> : vector<8x128xf32>
    %26 = tpu.matmul %2, %25, %cst_19 {dimension_numbers = #tpu.dot_dimension_numbers<[1], [0], [0], [1], [0, 0, 1, 1], [], []>} : vector<8x12xf32>, vector<12x128xf32>, vector<8x128xf32> -> vector<8x128xf32>
    %27 = vector.broadcast %0 : vector<8x1xf32> to vector<8x128xf32>
    %28 = arith.addf %26, %27 : vector<8x128xf32>
    %cst_20 = arith.constant dense<0.000000e+00> : vector<8x128xf32>
    %29 = tpu.matmul %3, %22, %cst_20 {dimension_numbers = #tpu.dot_dimension_numbers<[1], [0], [0], [1], [0, 0, 1, 1], [], []>} : vector<8x4xf32>, vector<4x128xf32>, vector<8x128xf32> -> vector<8x128xf32>
    %30 = vector.broadcast %1 : vector<8x1xf32> to vector<8x128xf32>
    %31 = arith.addf %29, %30 : vector<8x128xf32>
    %cst_21 = arith.constant 0.000000e+00 : f32
    %32 = vector.broadcast %cst_21 : f32 to vector<8x128xf32>
    %33 = arith.maximumf %28, %32 : vector<8x128xf32>
    %34 = arith.addf %33, %31 : vector<8x128xf32>
    %c1_22 = arith.constant 1 : index
    %c0_23 = arith.constant 0 : index
    %c0_24 = arith.constant 0 : index
    %35 = vector.load %arg5[%c1_22, %c0_23, %c0_24] : memref<2x8x128xf32, #tpu.memory_space<vmem>>, vector<1x8x128xf32>
    %36 = vector.shape_cast %35 : vector<1x8x128xf32> to vector<8x128xf32>
    %37 = vector.shape_cast %34 : vector<8x128xf32> to vector<1x8x128xf32>
    tpu.vector_store %arg5[%c1_22, %c0_23, %c0_24], %37 {strides = array<i32>} : memref<2x8x128xf32, #tpu.memory_space<vmem>>, vector<1x8x128xf32>,
    return
  }
  func.func @transform_0(%arg0: i32) -> (i32, i32, i32) {
    %c0_i32 = arith.constant 0 : i32
    %c0_i32_0 = arith.constant 0 : i32
    %c0_i32_1 = arith.constant 0 : i32
    return %arg0, %c0_i32, %c0_i32_0 : i32, i32, i32
  }
  func.func @transform_1(%arg0: i32) -> (i32, i32) {
    %c0_i32 = arith.constant 0 : i32
    %c0_i32_0 = arith.constant 0 : i32
    %c0_i32_1 = arith.constant 0 : i32
    return %c0_i32, %c0_i32_0 : i32, i32
  }
  func.func @transform_2(%arg0: i32) -> (i32, i32) {
    %c0_i32 = arith.constant 0 : i32
    %c0_i32_0 = arith.constant 0 : i32
    %c0_i32_1 = arith.constant 0 : i32
    return %c0_i32, %c0_i32_0 : i32, i32
  }
  func.func @transform_3(%arg0: i32) -> (i32, i32) {
    %c0_i32 = arith.constant 0 : i32
    %c0_i32_0 = arith.constant 0 : i32
    %c0_i32_1 = arith.constant 0 : i32
    return %c0_i32, %c0_i32_0 : i32, i32
  }
  func.func @transform_4(%arg0: i32) -> (i32, i32, i32) {
    %c0_i32 = arith.constant 0 : i32
    %c0_i32_0 = arith.constant 0 : i32
    %c0_i32_1 = arith.constant 0 : i32
    return %arg0, %c0_i32, %c0_i32_0 : i32, i32, i32
  }
}

</mosaic_0001>

<llo_original>
// kernel: block_forward.1
$region0: #{block_forward.1}
  #allocation0 [shape = 'u32[]', space=smem, size = 0x4, offset = 0x4, fixed_abs, tag = 'smem constant byte address 0x4 - core index']
  #allocation1 [shape = 'u32[144,128]{1,0:T(1,128)}', space=vmem, size = 0x12000, scoped, tag = 'internal scratch']
  %s0 = inlined_call_operand.vmem [shape: f32[2,4,128], index: 0, kind: input, shape index: {}]
  %s1 = inlined_call_operand.vmem [shape: f32[8,12], index: 1, kind: input, shape index: {}]
  %s2 = inlined_call_operand.vmem [shape: f32[8,4], index: 2, kind: input, shape index: {}]
  %s3 = inlined_call_operand.vmem [shape: f32[8,2], index: 3, kind: input, shape index: {}]
  %s4 = inlined_call_operand.hbm [shape: f32[2,8,128], index: 4, kind: output, shape index: {}]
  %s5 = sld [smem:[#allocation0]]
  $region26: #{block_forward.1} parent=0
    _
  %s7 = ssub.s32 1, %s5
  %s8 = scalar_select 0, %s7, %s5
  $region1: #{block_forward.1} parent=0
    #allocation2 [shape = 'u8[8192]{0}', space=vmem, size = 0x2000, scoped, tag = 'output window, operand 0, single buffered']
    #allocation3 [shape = 's32[1]{0}', space=sflag, size = 0x4, scoped, tag = 'scoped memory for block_forward.1']
    %9 = vsyncpa [#allocation3], 0
    // Predicated region
    $region2: #{block_forward.1} parent=1 // pred_check
      _
    $region3: #{block_forward.1} parent=1 // pred_check_branch
      %11 = sbr.rel (0) target = $region5
    $region4: #{block_forward.1} parent=1 // pred_region
      _
    $region5: #{block_forward.1} parent=1 // pred_fallthru
      _
    // Predicated region
    $region6: #{block_forward.1} parent=1 // pred_check
      _
    $region7: #{block_forward.1} parent=1 // pred_check_branch
      %13 = sbr.rel (0) target = $region9
    $region8: #{block_forward.1} parent=1 // pred_region
      _
    $region9: #{block_forward.1} parent=1 // pred_fallthru
      _
    // Predicated region
    $region10: #{block_forward.1} parent=1 // pred_check
      _
    $region11: #{block_forward.1} parent=1 // pred_check_branch
      %15 = sbr.rel (0) target = $region13
    $region12: #{block_forward.1} parent=1 // pred_region
      _
    $region13: #{block_forward.1} parent=1 // pred_fallthru
      _
    // Predicated region
    $region14: #{block_forward.1} parent=1 // pred_check
      _
    $region15: #{block_forward.1} parent=1 // pred_check_branch
      %17 = sbr.rel (0) target = $region17
    $region16: #{block_forward.1} parent=1 // pred_region
      _
    $region17: #{block_forward.1} parent=1 // pred_fallthru
      _
    %v18 = vld [vmem:[%s3] sm:$0xff]
    %v19 = vld [vmem:[%s1] sm:$0xff]
    %v20 = vld [vmem:[%s2] sm:$0xff]
    %v21 = vld [vmem:[%s0] sm:$0xf]
    %22 = vrot.lane.b32.xlu0 %v21, 2
    %v23 = vpop.permute.xlu0 %22
    %24 = vrot.lane.b32.xlu0 %v21, 126
    %v25 = vpop.permute.xlu0 %24
    %v27 = vrot.slane %v21, 4
    %vm29 = vcmask 1043456
    %v30 = vsel %vm29, %v23, %v27
    %32 = vset.pattern.permute.xlu0 0
    %33 = vperm.xlu0 %32, %v18
    %v34 = vpop.permute.xlu0 %33
    %vm36 = vcmask 97280
    %v38 = vsel %vm36, %v19, 0
    %v41 = vsel %vm29, %v25, 0
    %43 = vmatprep.subr.mxu0 0.0
    %44 = vmatpush1.msra.mxu0 %v30
    %45 = vmatprep.subr.mxu0 0.0
    %46 = vmatpush1.msra.mxu0 %v41
    %47 = vmatprep.subr.mxu0 0.0
    %48 = vmatpush1.msra.mxu0 0.0
    %49 = vmatprep.subr.mxu0 0.0
    %50 = vmatpush1.msra.mxu0 0.0
    %51 = vmatprep.subr.mxu0 0.0
    %52 = vmatpush1.msra.mxu0 0.0
    %53 = vmatprep.subr.mxu0 0.0
    %54 = vmatpush1.msra.mxu0 0.0
    %55 = vmatprep.subr.mxu0 0.0
    %56 = vmatpush1.msra.mxu0 0.0
    %57 = vmatprep.subr.mxu0 0.0
    %58 = vmatpush1.msra.mxu0 0.0
    %59 = vmatprep.subr.mxu0 0.0
    %60 = vmatpush1.msra.mxu0 0.0
    %61 = vmatprep.subr.mxu0 0.0
    %62 = vmatpush1.msra.mxu0 0.0
    %63 = vmatprep.subr.mxu0 0.0
    %64 = vmatpush1.msra.mxu0 0.0
    %65 = vmatprep.subr.mxu0 0.0
    %66 = vmatpush1.msra.mxu0 0.0
    %67 = vmatprep.subr.mxu0 0.0
    %68 = vmatpush1.msra.mxu0 0.0
    %69 = vmatprep.subr.mxu0 0.0
    %70 = vmatpush1.msra.mxu0 0.0
    %71 = vmatprep.subr.mxu0 0.0
    %72 = vmatpush1.msra.mxu0 0.0
    %73 = vmatprep.subr.mxu0 0.0
    %74 = vmatpush1.msra.mxu0 0.0
    %75 = vmatprep.subr.mxu0 0.0
    %76 = vmatpush1.msra.mxu0 0.0
    %77 = vmatprep.subr.mxu0 0.0
    %78 = vmatpush1.msra.mxu0 0.0
    %79 = vmatprep.subr.mxu0 0.0
    %80 = vmatpush1.msra.mxu0 0.0
    %81 = vmatprep.subr.mxu0 0.0
    %82 = vmatpush1.msra.mxu0 0.0
    %83 = vmatprep.subr.mxu0 0.0
    %84 = vmatpush1.msra.mxu0 0.0
    %85 = vmatprep.subr.mxu0 0.0
    %86 = vmatpush1.msra.mxu0 0.0
    %87 = vmatprep.subr.mxu0 0.0
    %88 = vmatpush1.msra.mxu0 0.0
    %89 = vmatprep.subr.mxu0 0.0
    %90 = vmatpush1.msra.mxu0 0.0
    %91 = vmatprep.subr.mxu0 0.0
    %92 = vmatpush1.msra.mxu0 0.0
    %93 = vmatprep.subr.mxu0 0.0
    %94 = vmatpush1.msra.mxu0 0.0
    %95 = vmatprep.subr.mxu0 0.0
    %96 = vmatpush1.msra.mxu0 0.0
    %97 = vmatprep.subr.mxu0 0.0
    %98 = vmatpush1.msra.mxu0 0.0
    %99 = vmatprep.subr.mxu0 0.0
    %100 = vmatpush1.msra.mxu0 0.0
    %101 = vmatprep.subr.mxu0 0.0
    %102 = vmatpush1.msra.mxu0 0.0
    %103 = vmatprep.subr.mxu0 0.0
    %104 = vmatpush1.msra.mxu0 0.0
    %105 = vmatprep.subr.mxu0 0.0
    %106 = vmatpush1.msra.mxu0 0.0
    %107 = vmatprep.mubr.f32.mxu0 0.0
    %108 = vmatmul.mubr.f32.gmra.mrb[0].mxu0 %v38
    %v109 = vpop.f32.mrb[0].mxu0
    %v110 = vadd.f32 %v34, %v109
    %v111 = vpop.f32.mrb[0].mxu0
    %112 = vdwg.mxu0
    %113 = vset.pattern.permute.xlu0 1
    %114 = vperm.xlu0 %113, %v18
    %v115 = vpop.permute.xlu0 %114
    %vm117 = vcmask 31744
    %v119 = vsel %vm117, %v20, 0
    %v121 = vsel %vm29, %v21, 0
    %123 = vmatprep.subr.mxu0 0.0
    %124 = vmatpush1.msra.mxu0 %v121
    %125 = vmatprep.subr.mxu0 0.0
    %126 = vmatpush1.msra.mxu0 0.0
    %127 = vmatprep.subr.mxu0 0.0
    %128 = vmatpush1.msra.mxu0 0.0
    %129 = vmatprep.subr.mxu0 0.0
    %130 = vmatpush1.msra.mxu0 0.0
    %131 = vmatprep.subr.mxu0 0.0
    %132 = vmatpush1.msra.mxu0 0.0
    %133 = vmatprep.subr.mxu0 0.0
    %134 = vmatpush1.msra.mxu0 0.0
    %135 = vmatprep.subr.mxu0 0.0
    %136 = vmatpush1.msra.mxu0 0.0
    %137 = vmatprep.subr.mxu0 0.0
    %138 = vmatpush1.msra.mxu0 0.0
    %139 = vmatprep.subr.mxu0 0.0
    %140 = vmatpush1.msra.mxu0 0.0
    %141 = vmatprep.subr.mxu0 0.0
    %142 = vmatpush1.msra.mxu0 0.0
    %143 = vmatprep.subr.mxu0 0.0
    %144 = vmatpush1.msra.mxu0 0.0
    %145 = vmatprep.subr.mxu0 0.0
    %146 = vmatpush1.msra.mxu0 0.0
    %147 = vmatprep.subr.mxu0 0.0
    %148 = vmatpush1.msra.mxu0 0.0
    %149 = vmatprep.subr.mxu0 0.0
    %150 = vmatpush1.msra.mxu0 0.0
    %151 = vmatprep.subr.mxu0 0.0
    %152 = vmatpush1.msra.mxu0 0.0
    %153 = vmatprep.subr.mxu0 0.0
    %154 = vmatpush1.msra.mxu0 0.0
    %155 = vmatprep.subr.mxu0 0.0
    %156 = vmatpush1.msra.mxu0 0.0
    %157 = vmatprep.subr.mxu0 0.0
    %158 = vmatpush1.msra.mxu0 0.0
    %159 = vmatprep.subr.mxu0 0.0
    %160 = vmatpush1.msra.mxu0 0.0
    %161 = vmatprep.subr.mxu0 0.0
    %162 = vmatpush1.msra.mxu0 0.0
    %163 = vmatprep.subr.mxu0 0.0
    %164 = vmatpush1.msra.mxu0 0.0
    %165 = vmatprep.subr.mxu0 0.0
    %166 = vmatpush1.msra.mxu0 0.0
    %167 = vmatprep.subr.mxu0 0.0
    %168 = vmatpush1.msra.mxu0 0.0
    %169 = vmatprep.subr.mxu0 0.0
    %170 = vmatpush1.msra.mxu0 0.0
    %171 = vmatprep.subr.mxu0 0.0
    %172 = vmatpush1.msra.mxu0 0.0
    %173 = vmatprep.subr.mxu0 0.0
    %174 = vmatpush1.msra.mxu0 0.0
    %175 = vmatprep.subr.mxu0 0.0
    %176 = vmatpush1.msra.mxu0 0.0
    %177 = vmatprep.subr.mxu0 0.0
    %178 = vmatpush1.msra.mxu0 0.0
    %179 = vmatprep.subr.mxu0 0.0
    %180 = vmatpush1.msra.mxu0 0.0
    %181 = vmatprep.subr.mxu0 0.0
    %182 = vmatpush1.msra.mxu0 0.0
    %183 = vmatprep.subr.mxu0 0.0
    %184 = vmatpush1.msra.mxu0 0.0
    %185 = vmatprep.subr.mxu0 0.0
    %186 = vmatpush1.msra.mxu0 0.0
    %187 = vmatprep.mubr.f32.mxu0 0.0
    %188 = vmatmul.mubr.f32.gmra.mrb[0].mxu0 %v119
    %v189 = vpop.f32.mrb[0].mxu0
    %v190 = vadd.f32 %v115, %v189
    %v191 = vpop.f32.mrb[0].mxu0
    %192 = vdwg.mxu0
    %v193 = vmax.f32 %v110, 0.0
    %v194 = vadd.f32 %v193, %v190
    %195 = vst [vmem:[#allocation2] sm:$0xff] %v194
    %s196 = scalar_lea.vmem %s0, 4
    %v197 = vld [vmem:[%s196] sm:$0xf]
    %198 = vrot.lane.b32.xlu0 %v197, 2
    %v199 = vpop.permute.xlu0 %198
    %200 = vrot.lane.b32.xlu0 %v197, 126
    %v201 = vpop.permute.xlu0 %200
    %v203 = vrot.slane %v197, 4
    %v205 = vsel %vm29, %v199, %v203
    %v207 = vsel %vm29, %v201, 0
    %209 = vmatprep.subr.mxu0 0.0
    %210 = vmatpush1.msra.mxu0 %v205
    %211 = vmatprep.subr.mxu0 0.0
    %212 = vmatpush1.msra.mxu0 %v207
    %213 = vmatprep.subr.mxu0 0.0
    %214 = vmatpush1.msra.mxu0 0.0
    %215 = vmatprep.subr.mxu0 0.0
    %216 = vmatpush1.msra.mxu0 0.0
    %217 = vmatprep.subr.mxu0 0.0
    %218 = vmatpush1.msra.mxu0 0.0
    %219 = vmatprep.subr.mxu0 0.0
    %220 = vmatpush1.msra.mxu0 0.0
    %221 = vmatprep.subr.mxu0 0.0
    %222 = vmatpush1.msra.mxu0 0.0
    %223 = vmatprep.subr.mxu0 0.0
    %224 = vmatpush1.msra.mxu0 0.0
    %225 = vmatprep.subr.mxu0 0.0
    %226 = vmatpush1.msra.mxu0 0.0
    %227 = vmatprep.subr.mxu0 0.0
    %228 = vmatpush1.msra.mxu0 0.0
    %229 = vmatprep.subr.mxu0 0.0
    %230 = vmatpush1.msra.mxu0 0.0
    %231 = vmatprep.subr.mxu0 0.0
    %232 = vmatpush1.msra.mxu0 0.0
    %233 = vmatprep.subr.mxu0 0.0
    %234 = vmatpush1.msra.mxu0 0.0
    %235 = vmatprep.subr.mxu0 0.0
    %236 = vmatpush1.msra.mxu0 0.0
    %237 = vmatprep.subr.mxu0 0.0
    %238 = vmatpush1.msra.mxu0 0.0
    %239 = vmatprep.subr.mxu0 0.0
    %240 = vmatpush1.msra.mxu0 0.0
    %241 = vmatprep.subr.mxu0 0.0
    %242 = vmatpush1.msra.mxu0 0.0
    %243 = vmatprep.subr.mxu0 0.0
    %244 = vmatpush1.msra.mxu0 0.0
    %245 = vmatprep.subr.mxu0 0.0
    %246 = vmatpush1.msra.mxu0 0.0
    %247 = vmatprep.subr.mxu0 0.0
    %248 = vmatpush1.msra.mxu0 0.0
    %249 = vmatprep.subr.mxu0 0.0
    %250 = vmatpush1.msra.mxu0 0.0
    %251 = vmatprep.subr.mxu0 0.0
    %252 = vmatpush1.msra.mxu0 0.0
    %253 = vmatprep.subr.mxu0 0.0
    %254 = vmatpush1.msra.mxu0 0.0
    %255 = vmatprep.subr.mxu0 0.0
    %256 = vmatpush1.msra.mxu0 0.0
    %257 = vmatprep.subr.mxu0 0.0
    %258 = vmatpush1.msra.mxu0 0.0
    %259 = vmatprep.subr.mxu0 0.0
    %260 = vmatpush1.msra.mxu0 0.0
    %261 = vmatprep.subr.mxu0 0.0
    %262 = vmatpush1.msra.mxu0 0.0
    %263 = vmatprep.subr.mxu0 0.0
    %264 = vmatpush1.msra.mxu0 0.0
    %265 = vmatprep.subr.mxu0 0.0
    %266 = vmatpush1.msra.mxu0 0.0
    %267 = vmatprep.subr.mxu0 0.0
    %268 = vmatpush1.msra.mxu0 0.0
    %269 = vmatprep.subr.mxu0 0.0
    %270 = vmatpush1.msra.mxu0 0.0
    %271 = vmatprep.subr.mxu0 0.0
    %272 = vmatpush1.msra.mxu0 0.0
    %273 = vmatprep.mubr.f32.mxu0 0.0
    %274 = vmatmul.mubr.f32.gmra.mrb[0].mxu0 %v38
    %v275 = vpop.f32.mrb[0].mxu0
    %v276 = vadd.f32 %v34, %v275
    %v277 = vpop.f32.mrb[0].mxu0
    %278 = vdwg.mxu0
    %v279 = vsel %vm29, %v197, 0
    %281 = vmatprep.subr.mxu0 0.0
    %282 = vmatpush1.msra.mxu0 %v279
    %283 = vmatprep.subr.mxu0 0.0
    %284 = vmatpush1.msra.mxu0 0.0
    %285 = vmatprep.subr.mxu0 0.0
    %286 = vmatpush1.msra.mxu0 0.0
    %287 = vmatprep.subr.mxu0 0.0
    %288 = vmatpush1.msra.mxu0 0.0
    %289 = vmatprep.subr.mxu0 0.0
    %290 = vmatpush1.msra.mxu0 0.0
    %291 = vmatprep.subr.mxu0 0.0
    %292 = vmatpush1.msra.mxu0 0.0
    %293 = vmatprep.subr.mxu0 0.0
    %294 = vmatpush1.msra.mxu0 0.0
    %295 = vmatprep.subr.mxu0 0.0
    %296 = vmatpush1.msra.mxu0 0.0
    %297 = vmatprep.subr.mxu0 0.0
    %298 = vmatpush1.msra.mxu0 0.0
    %299 = vmatprep.subr.mxu0 0.0
    %300 = vmatpush1.msra.mxu0 0.0
    %301 = vmatprep.subr.mxu0 0.0
    %302 = vmatpush1.msra.mxu0 0.0
    %303 = vmatprep.subr.mxu0 0.0
    %304 = vmatpush1.msra.mxu0 0.0
    %305 = vmatprep.subr.mxu0 0.0
    %306 = vmatpush1.msra.mxu0 0.0
    %307 = vmatprep.subr.mxu0 0.0
    %308 = vmatpush1.msra.mxu0 0.0
    %309 = vmatprep.subr.mxu0 0.0
    %310 = vmatpush1.msra.mxu0 0.0
    %311 = vmatprep.subr.mxu0 0.0
    %312 = vmatpush1.msra.mxu0 0.0
    %313 = vmatprep.subr.mxu0 0.0
    %314 = vmatpush1.msra.mxu0 0.0
    %315 = vmatprep.subr.mxu0 0.0
    %316 = vmatpush1.msra.mxu0 0.0
    %317 = vmatprep.subr.mxu0 0.0
    %318 = vmatpush1.msra.mxu0 0.0
    %319 = vmatprep.subr.mxu0 0.0
    %320 = vmatpush1.msra.mxu0 0.0
    %321 = vmatprep.subr.mxu0 0.0
    %322 = vmatpush1.msra.mxu0 0.0
    %323 = vmatprep.subr.mxu0 0.0
    %324 = vmatpush1.msra.mxu0 0.0
    %325 = vmatprep.subr.mxu0 0.0
    %326 = vmatpush1.msra.mxu0 0.0
    %327 = vmatprep.subr.mxu0 0.0
    %328 = vmatpush1.msra.mxu0 0.0
    %329 = vmatprep.subr.mxu0 0.0
    %330 = vmatpush1.msra.mxu0 0.0
    %331 = vmatprep.subr.mxu0 0.0
    %332 = vmatpush1.msra.mxu0 0.0
    %333 = vmatprep.subr.mxu0 0.0
    %334 = vmatpush1.msra.mxu0 0.0
    %335 = vmatprep.subr.mxu0 0.0
    %336 = vmatpush1.msra.mxu0 0.0
    %337 = vmatprep.subr.mxu0 0.0
    %338 = vmatpush1.msra.mxu0 0.0
    %339 = vmatprep.subr.mxu0 0.0
    %340 = vmatpush1.msra.mxu0 0.0
    %341 = vmatprep.subr.mxu0 0.0
    %342 = vmatpush1.msra.mxu0 0.0
    %343 = vmatprep.subr.mxu0 0.0
    %344 = vmatpush1.msra.mxu0 0.0
    %345 = vmatprep.mubr.f32.mxu0 0.0
    %346 = vmatmul.mubr.f32.gmra.mrb[0].mxu0 %v119
    %v347 = vpop.f32.mrb[0].mxu0
    %v348 = vadd.f32 %v115, %v347
    %v349 = vpop.f32.mrb[0].mxu0
    %350 = vdwg.mxu0
    %v351 = vmax.f32 %v276, 0.0
    %v352 = vadd.f32 %v351, %v348
    %s353 = scalar_lea.vmem [#allocation2], 8
    %354 = vst [vmem:[%s353] sm:$0xff] %v352
    // Predicated region
    $region18: #{block_forward.1} parent=1 // pred_check
      _
    $region19: #{block_forward.1} parent=1 // pred_check_branch
      %356 = sbr.rel (0) target = $region21
    $region20: #{block_forward.1} parent=1 // pred_region
      %s358 = ssub.s32 256, 256
      %359 = vsyncadd [#allocation3], %s358
      %s360 = sshll.u32 [#allocation2], 4
      %s361 = int_to_ptr.vmem [resolvable:$true] %s360
      %366 = dma.vmem_to_hbm [thread:$0]  %s361, 256, %s4, [#allocation3], 128, 128, 8
    $region21: #{block_forward.1} parent=1 // pred_fallthru
      _
    // Predicated region
    $region22: #{block_forward.1} parent=1 // pred_check
      _
    $region23: #{block_forward.1} parent=1 // pred_check_branch
      %368 = sbr.rel (0) target = $region25
    $region24: #{block_forward.1} parent=1 // pred_region
      %369 = dma.done [#allocation3], 256
    $region25: #{block_forward.1} parent=1 // pred_fallthru
      _
    %370 = vsyncpa [#allocation3], 1

</llo_original>
